<compile_context>
chip_gen: v6e
topology: v6e:2x2x1
jax: 0.10.0
libtpu: 0.0.40
codegen_flags: <defaults>
</compile_context>

<pallas_src>
import jax
import jax.numpy as jnp
from jax import lax
from jax.experimental import pallas as pl
from jax.experimental.pallas import tpu as pltpu

HIDDEN_SIZES = [64, 32, 16, 8]


def ann_kernel(x_ref,
               w0_ref, b0_ref, w1_ref, b1_ref, w2_ref, b2_ref,
               w3_ref, b3_ref, w4_ref, b4_ref,
               o_ref):
    # x_ref is ROW-MAJOR (TB, in_features) f32; weights are PyTorch [out, in] bf16;
    # biases are [out, 1] f32 columns (broadcast over the lane/batch dim).
    mxu_dtype = w0_ref.dtype

    # First layer: cast f32->bf16 in-kernel and contract W0 axis 1 (in) against
    # x axis 1 (in).  This produces the feature-major (64, TB) activation directly,
    # fusing the layout change into the matmul (any shuffle lands on the idle XLU).
    x = x_ref[...].astype(mxu_dtype)                              # (TB, in) bf16
    h = lax.dot_general(w0_ref[...], x,
                        dimension_numbers=(((1,), (1,)), ((), ())),
                        preferred_element_type=jnp.float32)       # (64, TB) f32
    h = jnp.maximum(h + b0_ref[...], 0.0).astype(mxu_dtype)       # (64, TB) bf16

    def dense_relu(h, w_ref, b_ref):
        # bf16 MXU matmul with f32 accumulation; bias-add / ReLU in f32 (v5e has no
        # bf16 VALU), then pack back to bf16 for the next layer's MXU input.
        acc = jnp.dot(w_ref[...], h, preferred_element_type=jnp.float32)
        return jnp.maximum(acc + b_ref[...], 0.0).astype(mxu_dtype)

    h = dense_relu(h, w1_ref, b1_ref)    # (32, TB)
    h = dense_relu(h, w2_ref, b2_ref)    # (16, TB)
    h = dense_relu(h, w3_ref, b3_ref)    # (8,  TB)

    z = jnp.dot(w4_ref[...], h, preferred_element_type=jnp.float32) + b4_ref[...]
    # Exact sigmoid; the (1, TB) epilogue is negligible either way and the output
    # store is fully lane-dense (TB is a multiple of 128).
    o_ref[...] = 1.0 / (1.0 + jnp.exp(-z))                        # (1, TB) f32


def _round_up(n, m):
    return (n + m - 1) // m * m


def init_params(key, input_size, hidden_sizes, output_size=1):
    """PyTorch nn.Linear default init: U(-1/sqrt(fan_in), +1/sqrt(fan_in)).

    Weights are stored in the PyTorch [out_features, in_features] layout; biases as
    [out_features, 1] columns (broadcast over the lane/batch dim inside the kernel).
    """
    dims = [input_size] + list(hidden_sizes) + [output_size]
    params = []
    for fan_in, fan_out in zip(dims[:-1], dims[1:]):
        key, kw, kb = jax.random.split(key, 3)
        bound = 1.0 / (fan_in ** 0.5)
        w = jax.random.uniform(kw, (fan_out, fan_in), jnp.float32, -bound, bound)
        b = jax.random.uniform(kb, (fan_out, 1), jnp.float32, -bound, bound)
        params.append((w, b))
    return params


def ann_forward(x, params, *, block_batch=4096, mxu_dtype=jnp.bfloat16):
    """x: (batch, in_features) f32 -> (batch, 1) f32 (sigmoid probabilities)."""
    batch, in_features = x.shape

    # Tile-size selection:
    #  * block_batch rounded up to a multiple of 128 (lane-dense tiles, (8,128) rule).
    #  * Large default tile (4096) amortizes the ~0.35 us per-grid-step overhead.
    #  * If the whole (>=2048-row) batch would fit a single tile, split it in two so
    #    the "parallel" grid axis can actually feed both of v7x's TensorCores.
    block_batch = _round_up(max(block_batch, 128), 128)
    padded = _round_up(max(batch, 1), 128)
    tb = min(block_batch, padded)
    if padded // tb < 2 and padded >= 2048:
        tb = _round_up(-(-padded // 2), 128)
    padded = _round_up(padded, tb)
    grid = (padded // tb,)

    # Row-major f32 input: no wrapper-side transpose/cast pass over HBM; the kernel
    # reads x once and does the cast + layout change on-chip.
    x_in = x.astype(jnp.float32)
    if padded != batch:
        x_in = jnp.pad(x_in, ((0, padded - batch), (0, 0)))

    flat_params = []
    for w, b in params:
        flat_params.append(w.astype(mxu_dtype))      # bf16 MXU operand
        flat_params.append(b.astype(jnp.float32))    # f32 bias (added to f32 accum)

    const_block = lambda i: (0, 0)   # weights/biases: same block every step -> VMEM-resident
    in_specs = [pl.BlockSpec((tb, in_features), lambda i: (i, 0))]
    in_specs += [pl.BlockSpec(p.shape, const_block) for p in flat_params]

    layer_dims = [in_features] + HIDDEN_SIZES + [1]
    macs = sum(a * b for a, b in zip(layer_dims[:-1], layer_dims[1:]))
    cost = pl.CostEstimate(
        flops=2 * padded * macs,
        transcendentals=padded,       # one exp per row
        bytes_accessed=int(x_in.size) * x_in.dtype.itemsize
        + sum(int(p.size) * p.dtype.itemsize for p in flat_params)
        + padded * 4,
    )

    out_t = pl.pallas_call(
        ann_kernel,
        out_shape=jax.ShapeDtypeStruct((1, padded), jnp.float32),
        grid=grid,
        in_specs=in_specs,
        out_specs=pl.BlockSpec((1, tb), lambda i: (0, i)),
        compiler_params=pltpu.CompilerParams(
            # Batch tiles are independent -> shard across v7x's 2 TensorCores.
            dimension_semantics=("parallel",),
        ),
        cost_estimate=cost,
    )(x_in, *flat_params)

    return out_t[0, :batch].reshape(batch, 1)


def ann_reference(x, params, mxu_dtype=jnp.bfloat16):
    """Plain-JAX reference mirroring the kernel's bf16-matmul / f32-accumulate math."""
    h = x.astype(mxu_dtype)
    n = len(params)
    for i, (w, b) in enumerate(params):
        z = jnp.dot(h, w.T.astype(mxu_dtype),
                    preferred_element_type=jnp.float32) + b[:, 0]
        if i < n - 1:
            h = jnp.maximum(z, 0.0).astype(mxu_dtype)
        else:
            h = jax.nn.sigmoid(z)
    return h


if __name__ == "__main__":
    key = jax.random.PRNGKey(0)
    k_params, k_x1, k_x2, k_x3 = jax.random.split(key, 4)

    input_size = 16
    params = init_params(k_params, input_size, HIDDEN_SIZES, output_size=1)

    fwd = jax.jit(ann_forward)

    # Tolerance covers bf16 MXU inputs; outputs are probabilities in (0, 1), so any
    # structural bug produces errors orders of magnitude larger than this.
    ATOL = 1e-2

    # Small demo shape consistent with the module (batch=8, input_size=16).
    x_small = jax.random.normal(k_x1, (8, input_size), jnp.float32)
    out_small = jax.block_until_ready(fwd(x_small, params))
    ref_small = jax.block_until_ready(ann_reference(x_small, params))
    assert out_small.shape == (8, 1), out_small.shape
    assert jnp.allclose(out_small, ref_small, atol=ATOL, rtol=0.0), float(
        jnp.max(jnp.abs(out_small - ref_small)))

    # Exercise batch padding + a multi-step pipelined grid (300 rows, TB=128 -> 3 steps).
    x_big = jax.random.normal(k_x2, (300, input_size), jnp.float32)
    out_big = jax.block_until_ready(ann_forward(x_big, params, block_batch=128))
    ref_big = jax.block_until_ready(ann_reference(x_big, params))
    assert out_big.shape == (300, 1), out_big.shape
    assert jnp.allclose(out_big, ref_big, atol=ATOL, rtol=0.0), float(
        jnp.max(jnp.abs(out_big - ref_big)))

    # Exercise the v7x two-tile split path (2304 rows, default block_batch -> tb=1152,
    # grid=(2,)) while staying a small, cheap shape.
    x_split = jax.random.normal(k_x3, (2304, input_size), jnp.float32)
    out_split = jax.block_until_ready(ann_forward(x_split, params))
    ref_split = jax.block_until_ready(ann_reference(x_split, params))
    assert out_split.shape == (2304, 1), out_split.shape
    assert jnp.allclose(out_split, ref_split, atol=ATOL, rtol=0.0), float(
        jnp.max(jnp.abs(out_split - ref_split)))

    print("KERNEL_OK")
</pallas_src>

<mosaic_0001>
module attributes {stable_mosaic.version = 11 : i64} {
  func.func @ann_kernel(%arg0: i32, %arg1: memref<128x16xf32, #tpu.memory_space<vmem>>, %arg2: memref<64x16xbf16, #tpu.memory_space<vmem>>, %arg3: memref<64x1xf32, #tpu.memory_space<vmem>>, %arg4: memref<32x64xbf16, #tpu.memory_space<vmem>>, %arg5: memref<32x1xf32, #tpu.memory_space<vmem>>, %arg6: memref<16x32xbf16, #tpu.memory_space<vmem>>, %arg7: memref<16x1xf32, #tpu.memory_space<vmem>>, %arg8: memref<8x16xbf16, #tpu.memory_space<vmem>>, %arg9: memref<8x1xf32, #tpu.memory_space<vmem>>, %arg10: memref<1x8xbf16, #tpu.memory_space<vmem>>, %arg11: memref<1x1xf32, #tpu.memory_space<vmem>>, %arg12: memref<1x128xf32, #tpu.memory_space<vmem>>) attributes {dimension_semantics = [#tpu.dimension_semantics<parallel>], iteration_bounds = array<i64: 1>, scalar_prefetch = 0 : i64, scratch_operands = 0 : i64, tpu.core_type = #tpu.core_type<tc>, window_params = [{transform_indices = @transform_0, window_bounds = array<i64: 128, 16>}, {pipeline_mode = #tpu.pipeline_mode<synchronous>, transform_indices = @transform_1, window_bounds = array<i64: 64, 16>}, {pipeline_mode = #tpu.pipeline_mode<synchronous>, transform_indices = @transform_2, window_bounds = array<i64: 64, 1>}, {pipeline_mode = #tpu.pipeline_mode<synchronous>, transform_indices = @transform_3, window_bounds = array<i64: 32, 64>}, {pipeline_mode = #tpu.pipeline_mode<synchronous>, transform_indices = @transform_4, window_bounds = array<i64: 32, 1>}, {pipeline_mode = #tpu.pipeline_mode<synchronous>, transform_indices = @transform_5, window_bounds = array<i64: 16, 32>}, {pipeline_mode = #tpu.pipeline_mode<synchronous>, transform_indices = @transform_6, window_bounds = array<i64: 16, 1>}, {pipeline_mode = #tpu.pipeline_mode<synchronous>, transform_indices = @transform_7, window_bounds = array<i64: 8, 16>}, {pipeline_mode = #tpu.pipeline_mode<synchronous>, transform_indices = @transform_8, window_bounds = array<i64: 8, 1>}, {pipeline_mode = #tpu.pipeline_mode<synchronous>, transform_indices = @transform_9, window_bounds = array<i64: 1, 8>}, {pipeline_mode = #tpu.pipeline_mode<synchronous>, transform_indices = @transform_10, window_bounds = array<i64: 1, 1>}, {transform_indices = @transform_11, window_bounds = array<i64: 1, 128>}]} {
    %c0 = arith.constant 0 : index
    %c0_0 = arith.constant 0 : index
    %0 = vector.load %arg1[%c0, %c0_0] : memref<128x16xf32, #tpu.memory_space<vmem>>, vector<128x16xf32>
    %1 = arith.truncf %0 : vector<128x16xf32> to vector<128x16xbf16>
    %c0_1 = arith.constant 0 : index
    %c0_2 = arith.constant 0 : index
    %2 = vector.load %arg2[%c0_1, %c0_2] : memref<64x16xbf16, #tpu.memory_space<vmem>>, vector<64x16xbf16>
    %cst = arith.constant dense<0.000000e+00> : vector<64x128xf32>
    %3 = tpu.matmul %2, %1, %cst {dimension_numbers = #tpu.dot_dimension_numbers<[1], [1], [0], [0], [0, 0, 1, 0], [], []>} : vector<64x16xbf16>, vector<128x16xbf16>, vector<64x128xf32> -> vector<64x128xf32>
    %c0_3 = arith.constant 0 : index
    %c0_4 = arith.constant 0 : index
    %4 = vector.load %arg3[%c0_3, %c0_4] : memref<64x1xf32, #tpu.memory_space<vmem>>, vector<64x1xf32>
    %5 = vector.broadcast %4 : vector<64x1xf32> to vector<64x128xf32>
    %6 = arith.addf %3, %5 : vector<64x128xf32>
    %cst_5 = arith.constant 0.000000e+00 : f32
    %7 = vector.broadcast %cst_5 : f32 to vector<64x128xf32>
    %8 = arith.maximumf %6, %7 : vector<64x128xf32>
    %9 = arith.truncf %8 : vector<64x128xf32> to vector<64x128xbf16>
    %c0_6 = arith.constant 0 : index
    %c0_7 = arith.constant 0 : index
    %10 = vector.load %arg4[%c0_6, %c0_7] : memref<32x64xbf16, #tpu.memory_space<vmem>>, vector<32x64xbf16>
    %cst_8 = arith.constant dense<0.000000e+00> : vector<32x128xf32>
    %11 = tpu.matmul %10, %9, %cst_8 {dimension_numbers = #tpu.dot_dimension_numbers<[1], [0], [0], [1], [0, 0, 1, 1], [], []>} : vector<32x64xbf16>, vector<64x128xbf16>, vector<32x128xf32> -> vector<32x128xf32>
    %c0_9 = arith.constant 0 : index
    %c0_10 = arith.constant 0 : index
    %12 = vector.load %arg5[%c0_9, %c0_10] : memref<32x1xf32, #tpu.memory_space<vmem>>, vector<32x1xf32>
    %13 = vector.broadcast %12 : vector<32x1xf32> to vector<32x128xf32>
    %14 = arith.addf %11, %13 : vector<32x128xf32>
    %cst_11 = arith.constant 0.000000e+00 : f32
    %15 = vector.broadcast %cst_11 : f32 to vector<32x128xf32>
    %16 = arith.maximumf %14, %15 : vector<32x128xf32>
    %17 = arith.truncf %16 : vector<32x128xf32> to vector<32x128xbf16>
    %c0_12 = arith.constant 0 : index
    %c0_13 = arith.constant 0 : index
    %18 = vector.load %arg6[%c0_12, %c0_13] : memref<16x32xbf16, #tpu.memory_space<vmem>>, vector<16x32xbf16>
    %cst_14 = arith.constant dense<0.000000e+00> : vector<16x128xf32>
    %19 = tpu.matmul %18, %17, %cst_14 {dimension_numbers = #tpu.dot_dimension_numbers<[1], [0], [0], [1], [0, 0, 1, 1], [], []>} : vector<16x32xbf16>, vector<32x128xbf16>, vector<16x128xf32> -> vector<16x128xf32>
    %c0_15 = arith.constant 0 : index
    %c0_16 = arith.constant 0 : index
    %20 = vector.load %arg7[%c0_15, %c0_16] : memref<16x1xf32, #tpu.memory_space<vmem>>, vector<16x1xf32>
    %21 = vector.broadcast %20 : vector<16x1xf32> to vector<16x128xf32>
    %22 = arith.addf %19, %21 : vector<16x128xf32>
    %cst_17 = arith.constant 0.000000e+00 : f32
    %23 = vector.broadcast %cst_17 : f32 to vector<16x128xf32>
    %24 = arith.maximumf %22, %23 : vector<16x128xf32>
    %25 = arith.truncf %24 : vector<16x128xf32> to vector<16x128xbf16>
    %c0_18 = arith.constant 0 : index
    %c0_19 = arith.constant 0 : index
    %26 = vector.load %arg8[%c0_18, %c0_19] : memref<8x16xbf16, #tpu.memory_space<vmem>>, vector<8x16xbf16>
    %cst_20 = arith.constant dense<0.000000e+00> : vector<8x128xf32>
    %27 = tpu.matmul %26, %25, %cst_20 {dimension_numbers = #tpu.dot_dimension_numbers<[1], [0], [0], [1], [0, 0, 1, 1], [], []>} : vector<8x16xbf16>, vector<16x128xbf16>, vector<8x128xf32> -> vector<8x128xf32>
    %c0_21 = arith.constant 0 : index
    %c0_22 = arith.constant 0 : index
    %28 = vector.load %arg9[%c0_21, %c0_22] : memref<8x1xf32, #tpu.memory_space<vmem>>, vector<8x1xf32>
    %29 = vector.broadcast %28 : vector<8x1xf32> to vector<8x128xf32>
    %30 = arith.addf %27, %29 : vector<8x128xf32>
    %cst_23 = arith.constant 0.000000e+00 : f32
    %31 = vector.broadcast %cst_23 : f32 to vector<8x128xf32>
    %32 = arith.maximumf %30, %31 : vector<8x128xf32>
    %33 = arith.truncf %32 : vector<8x128xf32> to vector<8x128xbf16>
    %c0_24 = arith.constant 0 : index
    %c0_25 = arith.constant 0 : index
    %34 = vector.load %arg10[%c0_24, %c0_25] : memref<1x8xbf16, #tpu.memory_space<vmem>>, vector<1x8xbf16>
    %cst_26 = arith.constant dense<0.000000e+00> : vector<1x128xf32>
    %35 = tpu.matmul %34, %33, %cst_26 {dimension_numbers = #tpu.dot_dimension_numbers<[1], [0], [0], [1], [0, 0, 1, 1], [], []>} : vector<1x8xbf16>, vector<8x128xbf16>, vector<1x128xf32> -> vector<1x128xf32>
    %c0_27 = arith.constant 0 : index
    %c0_28 = arith.constant 0 : index
    %36 = vector.load %arg11[%c0_27, %c0_28] : memref<1x1xf32, #tpu.memory_space<vmem>>, vector<1x1xf32>
    %37 = vector.broadcast %36 : vector<1x1xf32> to vector<1x128xf32>
    %38 = arith.addf %35, %37 : vector<1x128xf32>
    %cst_29 = arith.constant 0.000000e+00 : f32
    %39 = vector.broadcast %cst_29 : f32 to vector<1x128xf32>
    %40 = arith.subf %39, %38 : vector<1x128xf32>
    %41 = math.exp %40 : vector<1x128xf32>
    %cst_30 = arith.constant 1.000000e+00 : f32
    %42 = vector.broadcast %cst_30 : f32 to vector<1x128xf32>
    %43 = arith.addf %42, %41 : vector<1x128xf32>
    %cst_31 = arith.constant 1.000000e+00 : f32
    %44 = vector.broadcast %cst_31 : f32 to vector<1x128xf32>
    %45 = arith.divf %44, %43 : vector<1x128xf32>
    %c0_32 = arith.constant 0 : index
    %c0_33 = arith.constant 0 : index
    %46 = vector.load %arg12[%c0_32, %c0_33] : memref<1x128xf32, #tpu.memory_space<vmem>>, vector<1x128xf32>
    tpu.vector_store %arg12[%c0_32, %c0_33], %45 {strides = array<i32>} : memref<1x128xf32, #tpu.memory_space<vmem>>, vector<1x128xf32>,
    return
  }
  func.func @transform_0(%arg0: i32) -> (i32, i32) {
    %c0_i32 = arith.constant 0 : i32
    %c0_i32_0 = arith.constant 0 : i32
    return %arg0, %c0_i32 : i32, i32
  }
  func.func @transform_1(%arg0: i32) -> (i32, i32) {
    %c0_i32 = arith.constant 0 : i32
    %c0_i32_0 = arith.constant 0 : i32
    %c0_i32_1 = arith.constant 0 : i32
    return %c0_i32, %c0_i32_0 : i32, i32
  }
  func.func @transform_2(%arg0: i32) -> (i32, i32) {
    %c0_i32 = arith.constant 0 : i32
    %c0_i32_0 = arith.constant 0 : i32
    %c0_i32_1 = arith.constant 0 : i32
    return %c0_i32, %c0_i32_0 : i32, i32
  }
  func.func @transform_3(%arg0: i32) -> (i32, i32) {
    %c0_i32 = arith.constant 0 : i32
    %c0_i32_0 = arith.constant 0 : i32
    %c0_i32_1 = arith.constant 0 : i32
    return %c0_i32, %c0_i32_0 : i32, i32
  }
  func.func @transform_4(%arg0: i32) -> (i32, i32) {
    %c0_i32 = arith.constant 0 : i32
    %c0_i32_0 = arith.constant 0 : i32
    %c0_i32_1 = arith.constant 0 : i32
    return %c0_i32, %c0_i32_0 : i32, i32
  }
  func.func @transform_5(%arg0: i32) -> (i32, i32) {
    %c0_i32 = arith.constant 0 : i32
    %c0_i32_0 = arith.constant 0 : i32
    %c0_i32_1 = arith.constant 0 : i32
    return %c0_i32, %c0_i32_0 : i32, i32
  }
  func.func @transform_6(%arg0: i32) -> (i32, i32) {
    %c0_i32 = arith.constant 0 : i32
    %c0_i32_0 = arith.constant 0 : i32
    %c0_i32_1 = arith.constant 0 : i32
    return %c0_i32, %c0_i32_0 : i32, i32
  }
  func.func @transform_7(%arg0: i32) -> (i32, i32) {
    %c0_i32 = arith.constant 0 : i32
    %c0_i32_0 = arith.constant 0 : i32
    %c0_i32_1 = arith.constant 0 : i32
    return %c0_i32, %c0_i32_0 : i32, i32
  }
  func.func @transform_8(%arg0: i32) -> (i32, i32) {
    %c0_i32 = arith.constant 0 : i32
    %c0_i32_0 = arith.constant 0 : i32
    %c0_i32_1 = arith.constant 0 : i32
    return %c0_i32, %c0_i32_0 : i32, i32
  }
  func.func @transform_9(%arg0: i32) -> (i32, i32) {
    %c0_i32 = arith.constant 0 : i32
    %c0_i32_0 = arith.constant 0 : i32
    %c0_i32_1 = arith.constant 0 : i32
    return %c0_i32, %c0_i32_0 : i32, i32
  }
  func.func @transform_10(%arg0: i32) -> (i32, i32) {
    %c0_i32 = arith.constant 0 : i32
    %c0_i32_0 = arith.constant 0 : i32
    %c0_i32_1 = arith.constant 0 : i32
    return %c0_i32, %c0_i32_0 : i32, i32
  }
  func.func @transform_11(%arg0: i32) -> (i32, i32) {
    %c0_i32 = arith.constant 0 : i32
    %c0_i32_0 = arith.constant 0 : i32
    return %c0_i32, %arg0 : i32, i32
  }
}

</mosaic_0001>

<llo_original>
// kernel: ann_forward.1
$region0: #{ann_forward.1}
  #allocation0 [shape = 'u32[]', space=smem, size = 0x4, offset = 0x4, fixed_abs, tag = 'smem constant byte address 0x4 - core index']
  #allocation1 [shape = 'u32[144,128]{1,0:T(1,128)}', space=vmem, size = 0x12000, scoped, tag = 'internal scratch']
  #allocation2 [shape = 'f32[1,1]{1,0:T(1,128)S(1)}', space=vmem, size = 0x200, scoped, tag = 'scoped memory for ann_forward.1']
  %s0 = inlined_call_operand.vmem [shape: f32[128,16], index: 0, kind: input, shape index: {}]
  %s1 = inlined_call_operand.vmem [shape: bf16[64,16], index: 1, kind: input, shape index: {}]
  %s2 = inlined_call_operand.vmem [shape: f32[64,1], index: 2, kind: input, shape index: {}]
  %s3 = inlined_call_operand.vmem [shape: bf16[32,64], index: 3, kind: input, shape index: {}]
  %s4 = inlined_call_operand.vmem [shape: f32[32,1], index: 4, kind: input, shape index: {}]
  %s5 = inlined_call_operand.vmem [shape: bf16[16,32], index: 5, kind: input, shape index: {}]
  %s6 = inlined_call_operand.vmem [shape: f32[16,1], index: 6, kind: input, shape index: {}]
  %s7 = inlined_call_operand.vmem [shape: bf16[8,16], index: 7, kind: input, shape index: {}]
  %s8 = inlined_call_operand.vmem [shape: f32[8,1], index: 8, kind: input, shape index: {}]
  %s9 = inlined_call_operand.vmem [shape: bf16[1,8], index: 9, kind: input, shape index: {}]
  %s10 = inlined_call_operand.<no memory space> [shape: f32[1,1], index: 10, kind: input, shape index: {}]
  %s11 = inlined_call_operand.vmem [shape: f32[1,128], index: 11, kind: output, shape index: {}]
  %s12 = sld [smem:[#allocation0]]
  $region54: #{ann_forward.1} parent=0
    _
  %s14 = ssub.s32 1, %s12
  %s15 = scalar_select 0, %s14, %s12
  %v16 = vstv %s10
  %17 = vst [vmem:[#allocation2] sm:$0x1] %v16
  // Predicated region
  $region2: #{ann_forward.1} parent=0 // pred_check
    _
  $region3: #{ann_forward.1} parent=0 // pred_check_branch
    %19 = sbr.rel (0) target = $region5
  $region4: #{ann_forward.1} parent=0 // pred_region
    _
  $region5: #{ann_forward.1} parent=0 // pred_fallthru
    _
  // Predicated region
  $region6: #{ann_forward.1} parent=0 // pred_check
    _
  $region7: #{ann_forward.1} parent=0 // pred_check_branch
    %21 = sbr.rel (0) target = $region9
  $region8: #{ann_forward.1} parent=0 // pred_region
    _
  $region9: #{ann_forward.1} parent=0 // pred_fallthru
    _
  // Predicated region
  $region10: #{ann_forward.1} parent=0 // pred_check
    _
  $region11: #{ann_forward.1} parent=0 // pred_check_branch
    %23 = sbr.rel (0) target = $region13
  $region12: #{ann_forward.1} parent=0 // pred_region
    _
  $region13: #{ann_forward.1} parent=0 // pred_fallthru
    _
  // Predicated region
  $region14: #{ann_forward.1} parent=0 // pred_check
    _
  $region15: #{ann_forward.1} parent=0 // pred_check_branch
    %25 = sbr.rel (0) target = $region17
  $region16: #{ann_forward.1} parent=0 // pred_region
    _
  $region17: #{ann_forward.1} parent=0 // pred_fallthru
    _
  // Predicated region
  $region18: #{ann_forward.1} parent=0 // pred_check
    _
  $region19: #{ann_forward.1} parent=0 // pred_check_branch
    %27 = sbr.rel (0) target = $region21
  $region20: #{ann_forward.1} parent=0 // pred_region
    _
  $region21: #{ann_forward.1} parent=0 // pred_fallthru
    _
  // Predicated region
  $region22: #{ann_forward.1} parent=0 // pred_check
    _
  $region23: #{ann_forward.1} parent=0 // pred_check_branch
    %29 = sbr.rel (0) target = $region25
  $region24: #{ann_forward.1} parent=0 // pred_region
    _
  $region25: #{ann_forward.1} parent=0 // pred_fallthru
    _
  // Predicated region
  $region26: #{ann_forward.1} parent=0 // pred_check
    _
  $region27: #{ann_forward.1} parent=0 // pred_check_branch
    %31 = sbr.rel (0) target = $region29
  $region28: #{ann_forward.1} parent=0 // pred_region
    _
  $region29: #{ann_forward.1} parent=0 // pred_fallthru
    _
  // Predicated region
  $region30: #{ann_forward.1} parent=0 // pred_check
    _
  $region31: #{ann_forward.1} parent=0 // pred_check_branch
    %33 = sbr.rel (0) target = $region33
  $region32: #{ann_forward.1} parent=0 // pred_region
    _
  $region33: #{ann_forward.1} parent=0 // pred_fallthru
    _
  // Predicated region
  $region34: #{ann_forward.1} parent=0 // pred_check
    _
  $region35: #{ann_forward.1} parent=0 // pred_check_branch
    %35 = sbr.rel (0) target = $region37
  $region36: #{ann_forward.1} parent=0 // pred_region
    _
  $region37: #{ann_forward.1} parent=0 // pred_fallthru
    _
  // Predicated region
  $region38: #{ann_forward.1} parent=0 // pred_check
    _
  $region39: #{ann_forward.1} parent=0 // pred_check_branch
    %37 = sbr.rel (0) target = $region41
  $region40: #{ann_forward.1} parent=0 // pred_region
    _
  $region41: #{ann_forward.1} parent=0 // pred_fallthru
    _
  // Predicated region
  $region42: #{ann_forward.1} parent=0 // pred_check
    _
  $region43: #{ann_forward.1} parent=0 // pred_check_branch
    %39 = sbr.rel (0) target = $region45
  $region44: #{ann_forward.1} parent=0 // pred_region
    _
  $region45: #{ann_forward.1} parent=0 // pred_fallthru
    _
  %v41 = vld [vmem:[%s0] sm:$0xff]
  %v42 = vld [vmem:[%s0 + $0x8] sm:$0xff]
  %v43 = vld [vmem:[%s0 + $0x10] sm:$0xff]
  %v44 = vld [vmem:[%s0 + $0x18] sm:$0xff]
  %v45 = vld [vmem:[%s0 + $0x20] sm:$0xff]
  %v46 = vld [vmem:[%s0 + $0x28] sm:$0xff]
  %v47 = vld [vmem:[%s0 + $0x30] sm:$0xff]
  %v48 = vld [vmem:[%s0 + $0x38] sm:$0xff]
  %v49 = vld [vmem:[%s0 + $0x40] sm:$0xff]
  %v50 = vld [vmem:[%s0 + $0x48] sm:$0xff]
  %v51 = vld [vmem:[%s0 + $0x50] sm:$0xff]
  %v52 = vld [vmem:[%s0 + $0x58] sm:$0xff]
  %v53 = vld [vmem:[%s0 + $0x60] sm:$0xff]
  %v54 = vld [vmem:[%s0 + $0x68] sm:$0xff]
  %v55 = vld [vmem:[%s0 + $0x70] sm:$0xff]
  %v56 = vld [vmem:[%s0 + $0x78] sm:$0xff]
  %v57 = vpack.c.bf16 %v42, %v41
  %v58 = vpack.c.bf16 %v44, %v43
  %v59 = vpack.c.bf16 %v46, %v45
  %v60 = vpack.c.bf16 %v48, %v47
  %v61 = vpack.c.bf16 %v50, %v49
  %v62 = vpack.c.bf16 %v52, %v51
  %v63 = vpack.c.bf16 %v54, %v53
  %v64 = vpack.c.bf16 %v56, %v55
  %v65 = vld [vmem:[%s1] sm:$0xf]
  %v66 = vld [vmem:[%s1 + $0x4] sm:$0xf]
  %v67 = vld [vmem:[%s1 + $0x8] sm:$0xf]
  %v68 = vld [vmem:[%s1 + $0xc] sm:$0xf]
  %v69 = vld [vmem:[%s1 + $0x10] sm:$0xf]
  %v70 = vld [vmem:[%s1 + $0x14] sm:$0xf]
  %v71 = vld [vmem:[%s1 + $0x18] sm:$0xf]
  %v72 = vld [vmem:[%s1 + $0x1c] sm:$0xf]
  %v73 = vld [vmem:[%s2] sm:$0xff]
  %v74 = vld [vmem:[%s2 + $0x8] sm:$0xff]
  %v75 = vld [vmem:[%s2 + $0x10] sm:$0xff]
  %v76 = vld [vmem:[%s2 + $0x18] sm:$0xff]
  %v77 = vld [vmem:[%s2 + $0x20] sm:$0xff]
  %v78 = vld [vmem:[%s2 + $0x28] sm:$0xff]
  %v79 = vld [vmem:[%s2 + $0x30] sm:$0xff]
  %v80 = vld [vmem:[%s2 + $0x38] sm:$0xff]
  %82 = vset.pattern.permute.xlu0 0
  %83 = vperm.xlu0 %82, %v73
  %v84 = vpop.permute.xlu0 %83
  %87 = vset.pattern.permute.xlu0 0
  %88 = vperm.xlu0 %87, %v74
  %v89 = vpop.permute.xlu0 %88
  %92 = vset.pattern.permute.xlu0 0
  %93 = vperm.xlu0 %92, %v75
  %v94 = vpop.permute.xlu0 %93
  %97 = vset.pattern.permute.xlu0 0
  %98 = vperm.xlu0 %97, %v76
  %v99 = vpop.permute.xlu0 %98
  %102 = vset.pattern.permute.xlu0 0
  %103 = vperm.xlu0 %102, %v77
  %v104 = vpop.permute.xlu0 %103
  %107 = vset.pattern.permute.xlu0 0
  %108 = vperm.xlu0 %107, %v78
  %v109 = vpop.permute.xlu0 %108
  %112 = vset.pattern.permute.xlu0 0
  %113 = vperm.xlu0 %112, %v79
  %v114 = vpop.permute.xlu0 %113
  %117 = vset.pattern.permute.xlu0 0
  %118 = vperm.xlu0 %117, %v80
  %v119 = vpop.permute.xlu0 %118
  %v129 = vunpack.c.l.b16 %v65
  %v130 = vunpack.c.l.b16 %v66
  %v131 = vunpack.c.l.b16 %v67
  %v132 = vunpack.c.l.b16 %v68
  %v133 = vunpack.c.l.b16 %v69
  %v134 = vunpack.c.l.b16 %v70
  %v135 = vunpack.c.l.b16 %v71
  %v136 = vunpack.c.l.b16 %v72
  %v137 = vpack.c.b16 %v130, %v129
  %v138 = vpack.c.b16 %v132, %v131
  %v139 = vpack.c.b16 %v134, %v133
  %v140 = vpack.c.b16 %v136, %v135
  %vm141 = vcmask 130048
  %v143 = vsel %vm141, %v137, 0
  %v146 = vsel %vm141, %v138, 0
  %v149 = vsel %vm141, %v139, 0
  %v152 = vsel %vm141, %v140, 0
  %v155 = vsel %vm141, %v57, 0
  %v158 = vsel %vm141, %v58, 0
  %v161 = vsel %vm141, %v59, 0
  %v164 = vsel %vm141, %v60, 0
  %v167 = vsel %vm141, %v61, 0
  %v170 = vsel %vm141, %v62, 0
  %v173 = vsel %vm141, %v63, 0
  %v176 = vsel %vm141, %v64, 0
  %178 = vmatprep.subr.bf16.mxu0 0
  %179 = vmatpush1.bf16.xpose.msra.mxu0 %v176
  %180 = vmatprep.subr.bf16.mxu0 0
  %181 = vmatpush1.bf16.xpose.msra.mxu0 %v173
  %182 = vmatprep.subr.bf16.mxu0 0
  %183 = vmatpush1.bf16.xpose.msra.mxu0 %v170
  %184 = vmatprep.subr.bf16.mxu0 0
  %185 = vmatpush1.bf16.xpose.msra.mxu0 %v167
  %186 = vmatprep.subr.bf16.mxu0 0
  %187 = vmatpush1.bf16.xpose.msra.mxu0 %v164
  %188 = vmatprep.subr.bf16.mxu0 0
  %189 = vmatpush1.bf16.xpose.msra.mxu0 %v161
  %190 = vmatprep.subr.bf16.mxu0 0
  %191 = vmatpush1.bf16.xpose.msra.mxu0 %v158
  %192 = vmatprep.subr.bf16.mxu0 0
  %193 = vmatpush1.bf16.xpose.msra.mxu0 %v155
  %194 = vmatprep.subr.bf16.mxu0 0
  %195 = vmatpush2.bf16.xpose.msra.mxu0 0
  %196 = vmatprep.subr.bf16.mxu0 0
  %197 = vmatpush2.bf16.xpose.msra.mxu0 0
  %198 = vmatprep.subr.bf16.mxu0 0
  %199 = vmatpush2.bf16.xpose.msra.mxu0 0
  %200 = vmatprep.subr.bf16.mxu0 0
  %201 = vmatpush2.bf16.xpose.msra.mxu0 0
  %202 = vmatprep.subr.bf16.mxu0 0
  %203 = vmatpush2.bf16.xpose.msra.mxu0 0
  %204 = vmatprep.subr.bf16.mxu0 0
  %205 = vmatpush2.bf16.xpose.msra.mxu0 0
  %206 = vmatprep.subr.bf16.mxu0 0
  %207 = vmatpush2.bf16.xpose.msra.mxu0 0
  %208 = vmatprep.subr.bf16.mxu0 0
  %209 = vmatpush2.bf16.xpose.msra.mxu0 0
  %210 = vmatprep.mubr.bf16.mxu0 0
  %211 = vmatmul.mubr.bf16.gmra.mxu0 %v143
  %v212 = vpop.f32.mrf.mxu0
  %v213 = vadd.f32 %v84, %v212
  %v214 = vpop.f32.mrf.mxu0
  %v215 = vpop.f32.mrf.mxu0
  %v216 = vadd.f32 %v89, %v215
  %v217 = vpop.f32.mrf.mxu0
  %218 = vmatprep.mubr.bf16.mxu0 0
  %219 = vmatmul.mubr.bf16.gmra.mxu0 %v146
  %v220 = vpop.f32.mrf.mxu0
  %v221 = vadd.f32 %v94, %v220
  %v222 = vpop.f32.mrf.mxu0
  %v223 = vpop.f32.mrf.mxu0
  %v224 = vadd.f32 %v99, %v223
  %v225 = vpop.f32.mrf.mxu0
  %226 = vmatprep.mubr.bf16.mxu0 0
  %227 = vmatmul.mubr.bf16.gmra.mxu0 %v149
  %v228 = vpop.f32.mrf.mxu0
  %v229 = vadd.f32 %v104, %v228
  %v230 = vpop.f32.mrf.mxu0
  %v231 = vpop.f32.mrf.mxu0
  %v232 = vadd.f32 %v109, %v231
  %v233 = vpop.f32.mrf.mxu0
  %234 = vmatprep.mubr.bf16.mxu0 0
  %235 = vmatmul.mubr.bf16.gmra.mxu0 %v152
  %v236 = vpop.f32.mrf.mxu0
  %v237 = vadd.f32 %v114, %v236
  %v238 = vpop.f32.mrf.mxu0
  %v239 = vpop.f32.mrf.mxu0
  %v240 = vadd.f32 %v119, %v239
  %v241 = vpop.f32.mrf.mxu0
  %242 = vdwg.mxu0
  %v243 = vmax.f32 %v213, 0.0
  %v244 = vmax.f32 %v216, 0.0
  %v245 = vmax.f32 %v221, 0.0
  %v246 = vmax.f32 %v224, 0.0
  %v247 = vmax.f32 %v229, 0.0
  %v248 = vmax.f32 %v232, 0.0
  %v249 = vmax.f32 %v237, 0.0
  %v250 = vmax.f32 %v240, 0.0
  %v251 = vpack.c.bf16 %v244, %v243
  %v252 = vpack.c.bf16 %v246, %v245
  %v253 = vpack.c.bf16 %v248, %v247
  %v254 = vpack.c.bf16 %v250, %v249
  %v255 = vld [vmem:[%s3] sm:$0xf]
  %v256 = vld [vmem:[%s3 + $0x4] sm:$0xf]
  %v257 = vld [vmem:[%s3 + $0x8] sm:$0xf]
  %v258 = vld [vmem:[%s3 + $0xc] sm:$0xf]
  %v259 = vld [vmem:[%s4] sm:$0xff]
  %v260 = vld [vmem:[%s4 + $0x8] sm:$0xff]
  %v261 = vld [vmem:[%s4 + $0x10] sm:$0xff]
  %v262 = vld [vmem:[%s4 + $0x18] sm:$0xff]
  %264 = vset.pattern.permute.xlu0 0
  %265 = vperm.xlu0 %264, %v259
  %v266 = vpop.permute.xlu0 %265
  %269 = vset.pattern.permute.xlu0 0
  %270 = vperm.xlu0 %269, %v260
  %v271 = vpop.permute.xlu0 %270
  %274 = vset.pattern.permute.xlu0 0
  %275 = vperm.xlu0 %274, %v261
  %v276 = vpop.permute.xlu0 %275
  %279 = vset.pattern.permute.xlu0 0
  %280 = vperm.xlu0 %279, %v262
  %v281 = vpop.permute.xlu0 %280
  %v287 = vunpack.c.l.b16 %v255
  %v288 = vunpack.c.l.b16 %v256
  %v289 = vunpack.c.l.b16 %v257
  %v290 = vunpack.c.l.b16 %v258
  %v291 = vpack.c.b16 %v288, %v287
  %v292 = vpack.c.b16 %v290, %v289
  %vm293 = vcmask 523264
  %v295 = vsel %vm293, %v291, 0
  %v298 = vsel %vm293, %v292, 0
  %300 = vmatprep.subr.bf16.mxu0 0
  %301 = vmatpush1.bf16.msra.mxu0 0
  %302 = vmatprep.subr.bf16.mxu0 0
  %303 = vmatpush1.bf16.msra.mxu0 0
  %304 = vmatprep.subr.bf16.mxu0 0
  %305 = vmatpush1.bf16.msra.mxu0 0
  %306 = vmatprep.subr.bf16.mxu0 0
  %307 = vmatpush1.bf16.msra.mxu0 0
  %308 = vmatprep.subr.bf16.mxu0 0
  %309 = vmatpush1.bf16.msra.mxu0 %v254
  %310 = vmatprep.subr.bf16.mxu0 0
  %311 = vmatpush1.bf16.msra.mxu0 %v253
  %312 = vmatprep.subr.bf16.mxu0 0
  %313 = vmatpush1.bf16.msra.mxu0 %v252
  %314 = vmatprep.subr.bf16.mxu0 0
  %315 = vmatpush1.bf16.msra.mxu0 %v251
  %316 = vmatprep.subr.bf16.mxu0 0
  %317 = vmatpush2.bf16.msra.mxu0 0
  %318 = vmatprep.subr.bf16.mxu0 0
  %319 = vmatpush2.bf16.msra.mxu0 0
  %320 = vmatprep.subr.bf16.mxu0 0
  %321 = vmatpush2.bf16.msra.mxu0 0
  %322 = vmatprep.subr.bf16.mxu0 0
  %323 = vmatpush2.bf16.msra.mxu0 0
  %324 = vmatprep.subr.bf16.mxu0 0
  %325 = vmatpush2.bf16.msra.mxu0 0
  %326 = vmatprep.subr.bf16.mxu0 0
  %327 = vmatpush2.bf16.msra.mxu0 0
  %328 = vmatprep.subr.bf16.mxu0 0
  %329 = vmatpush2.bf16.msra.mxu0 0
  %330 = vmatprep.subr.bf16.mxu0 0
  %331 = vmatpush2.bf16.msra.mxu0 0
  %332 = vmatprep.mubr.bf16.mxu0 0
  %333 = vmatmul.mubr.bf16.gmra.mxu0 %v295
  %v334 = vpop.f32.mrf.mxu0
  %v335 = vadd.f32 %v266, %v334
  %v336 = vpop.f32.mrf.mxu0
  %v337 = vpop.f32.mrf.mxu0
  %v338 = vadd.f32 %v271, %v337
  %v339 = vpop.f32.mrf.mxu0
  %340 = vmatprep.mubr.bf16.mxu0 0
  %341 = vmatmul.mubr.bf16.gmra.mxu0 %v298
  %v342 = vpop.f32.mrf.mxu0
  %v343 = vadd.f32 %v276, %v342
  %v344 = vpop.f32.mrf.mxu0
  %v345 = vpop.f32.mrf.mxu0
  %v346 = vadd.f32 %v281, %v345
  %v347 = vpop.f32.mrf.mxu0
  %348 = vdwg.mxu0
  %v349 = vmax.f32 %v335, 0.0
  %v350 = vmax.f32 %v338, 0.0
  %v351 = vmax.f32 %v343, 0.0
  %v352 = vmax.f32 %v346, 0.0
  %v353 = vpack.c.bf16 %v350, %v349
  %v354 = vpack.c.bf16 %v352, %v351
  %v355 = vld [vmem:[%s5] sm:$0xf]
  %v356 = vld [vmem:[%s5 + $0x4] sm:$0xf]
  %v357 = vld [vmem:[%s6] sm:$0xff]
  %v358 = vld [vmem:[%s6 + $0x8] sm:$0xff]
  %360 = vset.pattern.permute.xlu0 0
  %361 = vperm.xlu0 %360, %v357
  %v362 = vpop.permute.xlu0 %361
  %365 = vset.pattern.permute.xlu0 0
  %366 = vperm.xlu0 %365, %v358
  %v367 = vpop.permute.xlu0 %366
  %v371 = vunpack.c.l.b16 %v355
  %v372 = vunpack.c.l.b16 %v356
  %v373 = vpack.c.b16 %v372, %v371
  %vm374 = vcmask 261120
  %v376 = vsel %vm374, %v373, 0
  %378 = vmatprep.subr.bf16.mxu0 0
  %379 = vmatpush1.bf16.msra.mxu0 0
  %380 = vmatprep.subr.bf16.mxu0 0
  %381 = vmatpush1.bf16.msra.mxu0 0
  %382 = vmatprep.subr.bf16.mxu0 0
  %383 = vmatpush1.bf16.msra.mxu0 0
  %384 = vmatprep.subr.bf16.mxu0 0
  %385 = vmatpush1.bf16.msra.mxu0 0
  %386 = vmatprep.subr.bf16.mxu0 0
  %387 = vmatpush1.bf16.msra.mxu0 0
  %388 = vmatprep.subr.bf16.mxu0 0
  %389 = vmatpush1.bf16.msra.mxu0 0
  %390 = vmatprep.subr.bf16.mxu0 0
  %391 = vmatpush1.bf16.msra.mxu0 %v354
  %392 = vmatprep.subr.bf16.mxu0 0
  %393 = vmatpush1.bf16.msra.mxu0 %v353
  %394 = vmatprep.subr.bf16.mxu0 0
  %395 = vmatpush2.bf16.msra.mxu0 0
  %396 = vmatprep.subr.bf16.mxu0 0
  %397 = vmatpush2.bf16.msra.mxu0 0
  %398 = vmatprep.subr.bf16.mxu0 0
  %399 = vmatpush2.bf16.msra.mxu0 0
  %400 = vmatprep.subr.bf16.mxu0 0
  %401 = vmatpush2.bf16.msra.mxu0 0
  %402 = vmatprep.subr.bf16.mxu0 0
  %403 = vmatpush2.bf16.msra.mxu0 0
  %404 = vmatprep.subr.bf16.mxu0 0
  %405 = vmatpush2.bf16.msra.mxu0 0
  %406 = vmatprep.subr.bf16.mxu0 0
  %407 = vmatpush2.bf16.msra.mxu0 0
  %408 = vmatprep.subr.bf16.mxu0 0
  %409 = vmatpush2.bf16.msra.mxu0 0
  %410 = vmatprep.mubr.bf16.mxu0 0
  %411 = vmatmul.mubr.bf16.gmra.mxu0 %v376
  %v412 = vpop.f32.mrf.mxu0
  %v413 = vadd.f32 %v362, %v412
  %v414 = vpop.f32.mrf.mxu0
  %v415 = vpop.f32.mrf.mxu0
  %v416 = vadd.f32 %v367, %v415
  %v417 = vpop.f32.mrf.mxu0
  %418 = vdwg.mxu0
  %v419 = vmax.f32 %v413, 0.0
  %v420 = vmax.f32 %v416, 0.0
  %v421 = vpack.c.bf16 %v420, %v419
  %v422 = vld [vmem:[%s7] sm:$0xf]
  %v423 = vld [vmem:[%s8] sm:$0xff]
  %425 = vset.pattern.permute.xlu0 0
  %426 = vperm.xlu0 %425, %v423
  %v427 = vpop.permute.xlu0 %426
  %v430 = vsel %vm141, %v422, 0
  %432 = vmatprep.subr.bf16.mxu0 0
  %433 = vmatpush1.bf16.msra.mxu0 0
  %434 = vmatprep.subr.bf16.mxu0 0
  %435 = vmatpush1.bf16.msra.mxu0 0
  %436 = vmatprep.subr.bf16.mxu0 0
  %437 = vmatpush1.bf16.msra.mxu0 0
  %438 = vmatprep.subr.bf16.mxu0 0
  %439 = vmatpush1.bf16.msra.mxu0 0
  %440 = vmatprep.subr.bf16.mxu0 0
  %441 = vmatpush1.bf16.msra.mxu0 0
  %442 = vmatprep.subr.bf16.mxu0 0
  %443 = vmatpush1.bf16.msra.mxu0 0
  %444 = vmatprep.subr.bf16.mxu0 0
  %445 = vmatpush1.bf16.msra.mxu0 0
  %446 = vmatprep.subr.bf16.mxu0 0
  %447 = vmatpush1.bf16.msra.mxu0 %v421
  %448 = vmatprep.subr.bf16.mxu0 0
  %449 = vmatpush2.bf16.msra.mxu0 0
  %450 = vmatprep.subr.bf16.mxu0 0
  %451 = vmatpush2.bf16.msra.mxu0 0
  %452 = vmatprep.subr.bf16.mxu0 0
  %453 = vmatpush2.bf16.msra.mxu0 0
  %454 = vmatprep.subr.bf16.mxu0 0
  %455 = vmatpush2.bf16.msra.mxu0 0
  %456 = vmatprep.subr.bf16.mxu0 0
  %457 = vmatpush2.bf16.msra.mxu0 0
  %458 = vmatprep.subr.bf16.mxu0 0
  %459 = vmatpush2.bf16.msra.mxu0 0
  %460 = vmatprep.subr.bf16.mxu0 0
  %461 = vmatpush2.bf16.msra.mxu0 0
  %462 = vmatprep.subr.bf16.mxu0 0
  %463 = vmatpush2.bf16.msra.mxu0 0
  %464 = vmatprep.mubr.bf16.mxu0 0
  %465 = vmatmul.mubr.bf16.gmra.mxu0 %v430
  %v466 = vpop.f32.mrf.mxu0
  %v467 = vadd.f32 %v427, %v466
  %v468 = vpop.f32.mrf.mxu0
  %v469 = vpop.f32.mrf.mxu0
  %v470 = vpop.f32.mrf.mxu0
  %471 = vdwg.mxu0
  %v472 = vmax.f32 %v467, 0.0
  %v473 = vpack.c.bf16 %v472, %v472
  %v474 = vld [vmem:[%s9] sm:$0x1]
  %v475 = vld [vmem:[#allocation2] sm:$0x1]
  %477 = vset.pattern.permute.xlu0 0
  %478 = vperm.xlu0 %477, %v475
  %v479 = vpop.permute.xlu0 %478
  %v481 = vlaneseq
  %v482 = vshrl.u32 %v481, 7
  %v483 = vsub.s32 0, %v482
  %v484 = vrot.slane %v479, %v483
  %vm485 = vcmask 64512
  %v487 = vsel %vm485, %v474, 0
  %vm489 = vcmask 1043456
  %v491 = vsel %vm489, %v473, 0
  %493 = vmatprep.subr.bf16.mxu0 0
  %494 = vmatpush1.bf16.msra.mxu0 0
  %495 = vmatprep.subr.bf16.mxu0 0
  %496 = vmatpush1.bf16.msra.mxu0 0
  %497 = vmatprep.subr.bf16.mxu0 0
  %498 = vmatpush1.bf16.msra.mxu0 0
  %499 = vmatprep.subr.bf16.mxu0 0
  %500 = vmatpush1.bf16.msra.mxu0 0
  %501 = vmatprep.subr.bf16.mxu0 0
  %502 = vmatpush1.bf16.msra.mxu0 0
  %503 = vmatprep.subr.bf16.mxu0 0
  %504 = vmatpush1.bf16.msra.mxu0 0
  %505 = vmatprep.subr.bf16.mxu0 0
  %506 = vmatpush1.bf16.msra.mxu0 0
  %507 = vmatprep.subr.bf16.mxu0 0
  %508 = vmatpush1.bf16.msra.mxu0 %v491
  %509 = vmatprep.subr.bf16.mxu0 0
  %510 = vmatpush2.bf16.msra.mxu0 0
  %511 = vmatprep.subr.bf16.mxu0 0
  %512 = vmatpush2.bf16.msra.mxu0 0
  %513 = vmatprep.subr.bf16.mxu0 0
  %514 = vmatpush2.bf16.msra.mxu0 0
  %515 = vmatprep.subr.bf16.mxu0 0
  %516 = vmatpush2.bf16.msra.mxu0 0
  %517 = vmatprep.subr.bf16.mxu0 0
  %518 = vmatpush2.bf16.msra.mxu0 0
  %519 = vmatprep.subr.bf16.mxu0 0
  %520 = vmatpush2.bf16.msra.mxu0 0
  %521 = vmatprep.subr.bf16.mxu0 0
  %522 = vmatpush2.bf16.msra.mxu0 0
  %523 = vmatprep.subr.bf16.mxu0 0
  %524 = vmatpush2.bf16.msra.mxu0 0
  %525 = vmatprep.mubr.bf16.mxu0 0
  %526 = vmatmul.mubr.bf16.gmra.mxu0 %v487
  %v527 = vpop.f32.mrf.mxu0
  %v528 = vadd.f32 %v484, %v527
  %v529 = vpop.f32.mrf.mxu0
  %v530 = vpop.f32.mrf.mxu0
  %v531 = vpop.f32.mrf.mxu0
  %532 = vdwg.mxu0
  %v533 = vsub.f32 0.0, %v528
  %v534 = vmul.f32 %v533, 1.442695
  %v535 = vpow.pop %v534
  %v536 = vadd.f32 %v535, 1.0
  %v537 = vrcp.pop %v536
  %v538 = vmul.f32 1.0, %v537
  %539 = vst [vmem:[%s11] sm:$0x1] %v538
  // Predicated region
  $region46: #{ann_forward.1} parent=0 // pred_check
    _
  $region47: #{ann_forward.1} parent=0 // pred_check_branch
    %541 = sbr.rel (0) target = $region49
  $region48: #{ann_forward.1} parent=0 // pred_region
    _
  $region49: #{ann_forward.1} parent=0 // pred_fallthru
    _
  // Predicated region
  $region50: #{ann_forward.1} parent=0 // pred_check
    _
  $region51: #{ann_forward.1} parent=0 // pred_check_branch
    %543 = sbr.rel (0) target = $region53
  $region52: #{ann_forward.1} parent=0 // pred_region
    _
  $region53: #{ann_forward.1} parent=0 // pred_fallthru
    _

</llo_original>
